<compile_context>
chip_gen: v5e
topology: v5e:2x2
jax: 0.10.0
libtpu: 0.0.40
codegen_flags: <defaults>
</compile_context>

<pallas_src>
import jax
import jax.numpy as jnp
from jax.experimental import pallas as pl
from jax.experimental.pallas import tpu as pltpu


# ---------------------------------------------------------------------------
# Kernel: pure broadcast multiply.  `a_ref` is either (1, TC) (per-column
# scale, dim=1) or (TR, 1) (per-row scale, dim=0); broadcasting covers both.
# ---------------------------------------------------------------------------
def _scale_kernel(x_ref, a_ref, o_ref):
    o_ref[...] = (x_ref[...] * a_ref[...]).astype(o_ref.dtype)


# ---------------------------------------------------------------------------
# Wrapper
# ---------------------------------------------------------------------------
def sv_dropout_2d(x, log_sigma, *, dim=1, threshold=0.5, training=False, key=None,
                  block_rows=512, block_cols=2048):
    """Pallas implementation of SVDropout2D.forward.

    x:         2D array.
    log_sigma: (n_features,) parameter.
    """
    assert x.ndim == 2, "Must be a 2D Tensor"
    n_features = log_sigma.shape[0]
    assert x.shape[dim] == n_features, "Mismatch tensor shape"
    thr = threshold / (1.0 - threshold)

    # ---- hoisted, loop-invariant per-feature scale (computed once, in f32) ---
    ls = log_sigma.astype(jnp.float32)
    if training:
        assert key is not None, "training mode needs a PRNG key for eps"
        sigma = jnp.exp(ls)
        eps = jax.random.normal(key, (n_features,), dtype=jnp.float32)
        scale = 1.0 + sigma * eps                        # a = 1 + sigma * eps
    else:
        scale = (jnp.exp(ls) < thr).astype(jnp.float32)  # hard mask

    fold = 1
    if dim == 1:
        # Features on the last (lane) axis: out = x * scale[None, :]
        x2 = x
        N, F = x2.shape
        a2 = scale.reshape(1, F)
        # Lane-densify small feature dims: fold `fold` consecutive rows into
        # the lane axis (free row-major reshape) and tile the scale to match,
        # so stores are unmasked full-lane vst instead of masked partials.
        if F < 128 and (128 % F == 0) and (N % (128 // F) == 0):
            fold = 128 // F
            x2 = x2.reshape(N // fold, fold * F)
            a2 = jnp.tile(a2, (1, fold))
        R, C = x2.shape
        tile_r = R if R <= block_rows else block_rows
        tile_c = C if C <= block_cols else block_cols
        a_spec = pl.BlockSpec((1, tile_c), lambda i, j: (0, j))
    else:
        # Features on the first (sublane) axis: out = x * scale[:, None].
        # No transpose passes through HBM; the (tile_r, 1) scale tile
        # broadcasts along lanes inside the kernel.
        x2 = x
        R, C = x2.shape
        a2 = scale.reshape(R, 1)
        tile_r = R if R <= block_rows else block_rows
        tile_c = C if C <= block_cols else block_cols
        a_spec = pl.BlockSpec((tile_r, 1), lambda i, j: (i, 0))

    grid = (pl.cdiv(R, tile_r), pl.cdiv(C, tile_c))
    x_spec = pl.BlockSpec((tile_r, tile_c), lambda i, j: (i, j))
    out_spec = pl.BlockSpec((tile_r, tile_c), lambda i, j: (i, j))

    out = pl.pallas_call(
        _scale_kernel,
        out_shape=jax.ShapeDtypeStruct((R, C), x.dtype),
        grid_spec=pltpu.PrefetchScalarGridSpec(
            num_scalar_prefetch=0,
            grid=grid,
            in_specs=[x_spec, a_spec],
            out_specs=out_spec,
        ),
        compiler_params=pltpu.CompilerParams(
            dimension_semantics=("parallel", "parallel"),
            vmem_limit_bytes=48 << 20,  # big tiles stay portable (v5e 16 MiB default)
        ),
    )(x2, a2)

    if dim == 1 and fold > 1:
        out = out.reshape(N, F)
    return out


# ---------------------------------------------------------------------------
# Main
# ---------------------------------------------------------------------------
if __name__ == "__main__":
    key = jax.random.PRNGKey(0)
    k_x, k_eps, k_x0 = jax.random.split(key, 3)

    # Parameter init exactly as the PyTorch module: log_sigma filled with -5.
    F = 32
    log_sigma = jnp.full((F,), -5.0, dtype=jnp.float32)
    thr = 0.5 / (1.0 - 0.5)

    # ---------------- dim=1: x is [N, n_features] ----------------
    N = 16
    x = jax.random.normal(k_x, (N, F), dtype=jnp.float32)

    # eval mode (deterministic masking path)
    out_eval = jax.block_until_ready(
        sv_dropout_2d(x, log_sigma, dim=1, threshold=0.5, training=False))
    ref_eval = x * (jnp.exp(log_sigma) < thr).astype(jnp.float32)[None, :]
    assert jnp.allclose(out_eval, ref_eval, atol=1e-6), "eval-mode mismatch (dim=1)"

    # training mode (stochastic column scaling with a fixed key)
    out_train = jax.block_until_ready(
        sv_dropout_2d(x, log_sigma, dim=1, threshold=0.5, training=True, key=k_eps))
    eps_ref = jax.random.normal(k_eps, (F,), dtype=jnp.float32)
    a_ref = 1.0 + jnp.exp(log_sigma) * eps_ref
    ref_train = x * a_ref[None, :]
    assert jnp.allclose(out_train, ref_train, atol=1e-6), "train-mode mismatch (dim=1)"

    # ---------------- dim=0: x is [n_features, M] (no transposes) ----------------
    M = 24
    x0 = jax.random.normal(k_x0, (F, M), dtype=jnp.float32)

    out0_train = jax.block_until_ready(
        sv_dropout_2d(x0, log_sigma, dim=0, threshold=0.5, training=True, key=k_eps))
    ref0_train = x0 * a_ref[:, None]
    assert jnp.allclose(out0_train, ref0_train, atol=1e-6), "train-mode mismatch (dim=0)"

    out0_eval = jax.block_until_ready(
        sv_dropout_2d(x0, log_sigma, dim=0, threshold=0.5, training=False))
    ref0_eval = x0 * (jnp.exp(log_sigma) < thr).astype(jnp.float32)[:, None]
    assert jnp.allclose(out0_eval, ref0_eval, atol=1e-6), "eval-mode mismatch (dim=0)"

    print("KERNEL_OK")
</pallas_src>

<mosaic_0001>
module attributes {stable_mosaic.version = 11 : i64} {
  func.func @_scale_kernel(%arg0: i32, %arg1: i32, %arg2: memref<4x128xf32, #tpu.memory_space<vmem>>, %arg3: memref<1x128xf32, #tpu.memory_space<vmem>>, %arg4: memref<4x128xf32, #tpu.memory_space<vmem>>) attributes {dimension_semantics = [#tpu.dimension_semantics<parallel>, #tpu.dimension_semantics<parallel>], iteration_bounds = array<i64: 1, 1>, scalar_prefetch = 0 : i64, scratch_operands = 0 : i64, tpu.core_type = #tpu.core_type<tc>, window_params = [{transform_indices = @transform_0, window_bounds = array<i64: 4, 128>}, {transform_indices = @transform_1, window_bounds = array<i64: 1, 128>}, {transform_indices = @transform_2, window_bounds = array<i64: 4, 128>}]} {
    %c0 = arith.constant 0 : index
    %c0_0 = arith.constant 0 : index
    %0 = vector.load %arg2[%c0, %c0_0] : memref<4x128xf32, #tpu.memory_space<vmem>>, vector<4x128xf32>
    %c0_1 = arith.constant 0 : index
    %c0_2 = arith.constant 0 : index
    %1 = vector.load %arg3[%c0_1, %c0_2] : memref<1x128xf32, #tpu.memory_space<vmem>>, vector<1x128xf32>
    %2 = vector.broadcast %1 : vector<1x128xf32> to vector<4x128xf32>
    %3 = arith.mulf %0, %2 : vector<4x128xf32>
    %c0_3 = arith.constant 0 : index
    %c0_4 = arith.constant 0 : index
    %4 = vector.load %arg4[%c0_3, %c0_4] : memref<4x128xf32, #tpu.memory_space<vmem>>, vector<4x128xf32>
    tpu.vector_store %arg4[%c0_3, %c0_4], %3 {strides = array<i32>} : memref<4x128xf32, #tpu.memory_space<vmem>>, vector<4x128xf32>,
    return
  }
  func.func @transform_0(%arg0: i32, %arg1: i32) -> (i32, i32) {
    %c0_i32 = arith.constant 0 : i32
    return %arg0, %arg1 : i32, i32
  }
  func.func @transform_1(%arg0: i32, %arg1: i32) -> (i32, i32) {
    %c0_i32 = arith.constant 0 : i32
    %c0_i32_0 = arith.constant 0 : i32
    return %c0_i32, %arg1 : i32, i32
  }
  func.func @transform_2(%arg0: i32, %arg1: i32) -> (i32, i32) {
    %c0_i32 = arith.constant 0 : i32
    return %arg0, %arg1 : i32, i32
  }
}

</mosaic_0001>

<llo_original>
// kernel: tpu_custom_call.1
$region0: #{tpu_custom_call.1}
  #allocation0 [shape = 'u32[]', space=smem, size = 0x4, offset = 0x4, fixed_abs, tag = 'smem constant byte address 0x4 - core index']
  #allocation1 [shape = 'u32[72,128]{1,0:T(1,128)}', space=vmem, size = 0x9000, scoped, tag = 'internal scratch']
  %s0 = inlined_call_operand.hbm [shape: f32[4,128], index: 0, kind: input, shape index: {}]
  %s1 = inlined_call_operand.hbm [shape: f32[1,128], index: 1, kind: input, shape index: {}]
  %s2 = inlined_call_operand.hbm [shape: f32[4,128], index: 2, kind: output, shape index: {}]
  %s3 = sld [smem:[#allocation0]]
  $region26: #{tpu_custom_call.1} parent=0
    _
  %s5 = ssub.s32 1, %s3
  %s6 = scalar_select 0, %s5, %s3
  $region1: #{tpu_custom_call.1} parent=0
    #allocation2 [shape = 'u8[2048]{0}', space=vmem, size = 0x800, scoped, tag = 'input window, operand 0, single buffered']
    #allocation3 [shape = 's32[1]{0}', space=sflag, size = 0x4, scoped, tag = 'scoped memory for tpu_custom_call.1']
    #allocation4 [shape = 's32[1]{0}', space=sflag, size = 0x4, scoped, tag = 'scoped memory for tpu_custom_call.1']
    #allocation5 [shape = 'u8[512]{0}', space=vmem, size = 0x400, scoped, tag = 'input window, operand 1, single buffered']
    #allocation6 [shape = 's32[1]{0}', space=sflag, size = 0x4, scoped, tag = 'scoped memory for tpu_custom_call.1']
    #allocation7 [shape = 'u8[2048]{0}', space=vmem, size = 0x800, scoped, tag = 'output window, operand 0, single buffered']
    %7 = vsyncpa [#allocation3], 0
    %8 = vsyncpa [#allocation6], 0
    %9 = vsyncpa [#allocation4], 0
    // Predicated region
    $region2: #{tpu_custom_call.1} parent=1 // pred_check
      _
    $region3: #{tpu_custom_call.1} parent=1 // pred_check_branch
      %11 = sbr.rel (0) target = $region5
    $region4: #{tpu_custom_call.1} parent=1 // pred_region
      %13 = vsyncadd [#allocation3], 0
      %s15 = sshll.u32 %s0, 4
      %s16 = int_to_ptr.hbm [resolvable:$true] %s15
      %s17 = sshll.u32 [#allocation2], 4
      %s18 = int_to_ptr.vmem [resolvable:$true] %s17
      %20 = dma.hbm_to_vmem [thread:$0]  %s16, 64, %s18, [#allocation3]
    $region5: #{tpu_custom_call.1} parent=1 // pred_fallthru
      _
    // Predicated region
    $region6: #{tpu_custom_call.1} parent=1 // pred_check
      _
    $region7: #{tpu_custom_call.1} parent=1 // pred_check_branch
      %22 = sbr.rel (0) target = $region9
    $region8: #{tpu_custom_call.1} parent=1 // pred_region
      %24 = vsyncadd [#allocation6], 0
      %s26 = sshll.u32 %s1, 4
      %s27 = int_to_ptr.hbm [resolvable:$true] %s26
      %s28 = sshll.u32 [#allocation5], 4
      %s29 = int_to_ptr.vmem [resolvable:$true] %s28
      %31 = dma.hbm_to_vmem [thread:$0]  %s27, 16, %s29, [#allocation6]
    $region9: #{tpu_custom_call.1} parent=1 // pred_fallthru
      _
    // Predicated region
    $region10: #{tpu_custom_call.1} parent=1 // pred_check
      _
    $region11: #{tpu_custom_call.1} parent=1 // pred_check_branch
      %33 = sbr.rel (0) target = $region13
    $region12: #{tpu_custom_call.1} parent=1 // pred_region
      %35 = dma.done [#allocation3], 64
    $region13: #{tpu_custom_call.1} parent=1 // pred_fallthru
      _
    // Predicated region
    $region14: #{tpu_custom_call.1} parent=1 // pred_check
      _
    $region15: #{tpu_custom_call.1} parent=1 // pred_check_branch
      %37 = sbr.rel (0) target = $region17
    $region16: #{tpu_custom_call.1} parent=1 // pred_region
      %39 = dma.done [#allocation6], 16
    $region17: #{tpu_custom_call.1} parent=1 // pred_fallthru
      _
    %v40 = vld [vmem:[#allocation2] sm:$0xf]
    %v41 = vld [vmem:[#allocation5] sm:$0x1]
    %v43 = vperm.slane %v41, 0
    %v45 = vmul.f32 %v40, %v43
    %46 = vst [vmem:[#allocation7] sm:$0xf] %v45
    // Predicated region
    $region18: #{tpu_custom_call.1} parent=1 // pred_check
      _
    $region19: #{tpu_custom_call.1} parent=1 // pred_check_branch
      %48 = sbr.rel (0) target = $region21
    $region20: #{tpu_custom_call.1} parent=1 // pred_region
      %50 = vsyncadd [#allocation4], 0
      %s52 = sshll.u32 [#allocation7], 4
      %s53 = int_to_ptr.vmem [resolvable:$true] %s52
      %s54 = sshll.u32 %s2, 4
      %s55 = int_to_ptr.hbm [resolvable:$true] %s54
      %57 = dma.vmem_to_hbm [thread:$0]  %s53, 64, %s55, [#allocation4]
    $region21: #{tpu_custom_call.1} parent=1 // pred_fallthru
      _
    // Predicated region
    $region22: #{tpu_custom_call.1} parent=1 // pred_check
      _
    $region23: #{tpu_custom_call.1} parent=1 // pred_check_branch
      %59 = sbr.rel (0) target = $region25
    $region24: #{tpu_custom_call.1} parent=1 // pred_region
      %61 = dma.done [#allocation4], 64
    $region25: #{tpu_custom_call.1} parent=1 // pred_fallthru
      _
    %62 = vsyncpa [#allocation3], 1
    %63 = vsyncpa [#allocation6], 1
    %64 = vsyncpa [#allocation4], 1

</llo_original>
